<compile_context>
chip_gen: v6e
topology: v6e:2x2x1
jax: 0.10.0
libtpu: 0.0.40
codegen_flags: <defaults>
</compile_context>

<pallas_src>
import math

import jax
import jax.numpy as jnp
from jax.experimental import pallas as pl
from jax.experimental.pallas import tpu as pltpu

_LANE = 128


def _round_up(n, m):
    return ((n + m - 1) // m) * m


def _cdiv(a, b):
    return -(-a // b)


def _vmem_capacity_bytes():
    """Trace-time VMEM capacity query; conservative fallback if unavailable."""
    try:
        return int(pltpu.get_tpu_info().vmem_capacity_bytes)
    except Exception:
        return 64 * 1024 * 1024  # v7x per-TensorCore physical — smallest generation


def _sublane_pack(itemsize):
    """Sublane packing factor of the (8,128) tile layout: f32->8, bf16->16, int8->32."""
    return max(8, 32 // max(1, itemsize))


def _choose_tile(B, C, itemsize, batch_tile=None):
    """Pick the lane tile `tb` and grid size `n` for a (C, B) lane-dense array.

    Returns (tb, n, block_bytes) where block_bytes is the *sublane-padded*
    VMEM footprint of one (C, tb) block.
    """
    padded_c = _round_up(C, _sublane_pack(itemsize))

    if batch_tile is not None:
        tb = int(batch_tile)
        if tb >= B:
            tb, n = B, 1
        else:
            tb = max(_LANE, (tb // _LANE) * _LANE)   # lane-dense multiple of 128
            n = _cdiv(B, tb)
        return tb, n, padded_c * tb * itemsize

    # ~1 MiB per block (HBM-roofline knee); keeps double-buffered in+out ~4 MiB,
    # comfortably inside every generation's scoped-VMEM default.
    cap = _vmem_capacity_bytes()
    target_block_bytes = max(256 * 1024, min(1024 * 1024, cap // 64))
    tb = max(_LANE, (target_block_bytes // (padded_c * itemsize)) // _LANE * _LANE)
    tb = min(tb, 64 * 1024)                          # review: cap at ~64k lanes

    if B <= tb:
        tb, n = B, 1                                 # single full-extent block
    else:
        # Pick the step count first (bounds pad/mask waste to <128*n columns),
        # round it up to an even number so v7x's 2 TensorCores split evenly.
        n = _cdiv(B, tb)
        if n % 2:
            n += 1
        tb = _round_up(_cdiv(B, n), _LANE)
        n = _cdiv(B, tb)

    return tb, n, padded_c * tb * itemsize


def _dnorm_kernel(x_ref, o_ref):
    # x_ref / o_ref: (C, tb) block — classes on sublanes, batch on the lane axis.
    x = x_ref[...].astype(jnp.float32)
    C = x_ref.shape[0]

    # Unrolled sum over the small, static class axis: C-1 VALU adds on (1, tb)
    # rows — no cross-lane (XLU) reduction needed.
    denom = x[0:1, :]
    for c in range(1, C):
        denom = denom + x[c:c + 1, :]

    # One reciprocal per batch column (1/C of the elements), broadcast multiply
    # over the C rows.  Exact reciprocal: the kernel is DMA-bound, EUP/VALU
    # choice is immaterial (per review), so keep the tighter numerics.
    inv = pl.reciprocal(denom, approx=False)
    o_ref[...] = (x * inv).astype(o_ref.dtype)


def dempster_normalize_lane_dense(x_cb, *, batch_tile=None):
    """Normalize a lane-dense (C, B) mass array over axis 0 (the class axis).

    This is the zero-relayout entry point: no transposes, no padding pass.
    Ragged batch tails (B not a multiple of the tile) are handled by Pallas'
    masked partial blocks.
    """
    C, B = x_cb.shape
    itemsize = jnp.dtype(x_cb.dtype).itemsize
    tb, n, block_bytes = _choose_tile(B, C, itemsize, batch_tile)

    # Double-buffered in+out blocks plus headroom for intermediates; explicit so
    # the scoped-VMEM limit means what it says on v5e/v6e/v7x alike.
    vmem_limit = int(min(32 * 1024 * 1024, max(6 * block_bytes, 16 * 1024 * 1024)))

    return pl.pallas_call(
        _dnorm_kernel,
        out_shape=jax.ShapeDtypeStruct((C, B), x_cb.dtype),
        grid=(n,),
        in_specs=[pl.BlockSpec((C, tb), lambda b: (0, b))],
        out_specs=pl.BlockSpec((C, tb), lambda b: (0, b)),
        compiler_params=pltpu.CompilerParams(
            dimension_semantics=("parallel",),
            vmem_limit_bytes=vmem_limit,
        ),
    )(x_cb)


def dempster_normalize(inputs, *, batch_tile=None):
    """inputs: (..., C).  Returns inputs / sum(inputs, -1, keepdims=True)."""
    orig_shape = inputs.shape
    C = orig_shape[-1]
    B = math.prod(orig_shape[:-1])

    # TODO(synk): these two transposes are the only remaining extra HBM passes;
    # keep activations in (C, B) across adjacent ECNN layers and call
    # dempster_normalize_lane_dense directly to remove them.
    xt = inputs.reshape(B, C).T                      # (C, B) lane-dense
    out_t = dempster_normalize_lane_dense(xt, batch_tile=batch_tile)
    return out_t.T.reshape(orig_shape)


def dempster_normalize_ref(inputs):
    """Pure-JAX reference matching the PyTorch module exactly."""
    return inputs / jnp.sum(inputs, axis=-1, keepdims=True)


if __name__ == "__main__":
    key = jax.random.PRNGKey(0)
    k1, k2, k3 = jax.random.split(key, 3)

    # Case 1: module-shaped small input (batch=6, n_prototypes=8, num_class=4 -> C=5),
    # positive masses as produced by the evidential mapping layers.
    x1 = jax.random.uniform(k1, (6, 8, 5), dtype=jnp.float32, minval=0.05, maxval=1.0)
    out1 = jax.block_until_ready(jax.jit(dempster_normalize)(x1))
    ref1 = dempster_normalize_ref(x1)
    assert out1.shape == x1.shape
    assert jnp.allclose(out1, ref1, atol=1e-5, rtol=1e-5), "case 1 mismatch"

    # Case 2: ragged batch (B=600) with a forced small tile -> multi-step grid
    # with a masked partial last block (exercises the no-pad tail handling).
    x2 = jax.random.uniform(k2, (2, 300, 5), dtype=jnp.float32, minval=0.05, maxval=1.0)
    out2 = jax.block_until_ready(dempster_normalize(x2, batch_tile=128))
    ref2 = dempster_normalize_ref(x2)
    assert out2.shape == x2.shape
    assert jnp.allclose(out2, ref2, atol=1e-5, rtol=1e-5), "case 2 mismatch"

    # Case 3: zero-relayout lane-dense path, (C, B) directly.
    x3 = jax.random.uniform(k3, (5, 640), dtype=jnp.float32, minval=0.05, maxval=1.0)
    out3 = jax.block_until_ready(dempster_normalize_lane_dense(x3))
    ref3 = x3 / jnp.sum(x3, axis=0, keepdims=True)
    assert jnp.allclose(out3, ref3, atol=1e-5, rtol=1e-5), "case 3 mismatch"

    print("KERNEL_OK")
</pallas_src>

<mosaic_0001>
module attributes {stable_mosaic.version = 11 : i64} {
  func.func @_dnorm_kernel(%arg0: i32, %arg1: memref<5x48xf32, #tpu.memory_space<vmem>>, %arg2: memref<5x48xf32, #tpu.memory_space<vmem>>) attributes {dimension_semantics = [#tpu.dimension_semantics<parallel>], iteration_bounds = array<i64: 1>, scalar_prefetch = 0 : i64, scratch_operands = 0 : i64, tpu.core_type = #tpu.core_type<tc>, window_params = [{transform_indices = @transform_0, window_bounds = array<i64: 5, 48>}, {transform_indices = @transform_1, window_bounds = array<i64: 5, 48>}]} {
    %c0 = arith.constant 0 : index
    %c0_0 = arith.constant 0 : index
    %0 = vector.load %arg1[%c0, %c0_0] : memref<5x48xf32, #tpu.memory_space<vmem>>, vector<5x48xf32>
    %1 = vector.extract_strided_slice %0 {offsets = [0, 0], sizes = [1, 48], strides = [1, 1]} : vector<5x48xf32> to vector<1x48xf32>
    %2 = vector.extract_strided_slice %0 {offsets = [1, 0], sizes = [1, 48], strides = [1, 1]} : vector<5x48xf32> to vector<1x48xf32>
    %3 = arith.addf %1, %2 : vector<1x48xf32>
    %4 = vector.extract_strided_slice %0 {offsets = [2, 0], sizes = [1, 48], strides = [1, 1]} : vector<5x48xf32> to vector<1x48xf32>
    %5 = arith.addf %3, %4 : vector<1x48xf32>
    %6 = vector.extract_strided_slice %0 {offsets = [3, 0], sizes = [1, 48], strides = [1, 1]} : vector<5x48xf32> to vector<1x48xf32>
    %7 = arith.addf %5, %6 : vector<1x48xf32>
    %8 = vector.extract_strided_slice %0 {offsets = [4, 0], sizes = [1, 48], strides = [1, 1]} : vector<5x48xf32> to vector<1x48xf32>
    %9 = arith.addf %7, %8 : vector<1x48xf32>
    %10 = tpu.reciprocal %9 : vector<1x48xf32> -> vector<1x48xf32>
    %11 = vector.broadcast %10 : vector<1x48xf32> to vector<5x48xf32>
    %12 = arith.mulf %0, %11 : vector<5x48xf32>
    %c0_1 = arith.constant 0 : index
    %c0_2 = arith.constant 0 : index
    %13 = vector.load %arg2[%c0_1, %c0_2] : memref<5x48xf32, #tpu.memory_space<vmem>>, vector<5x48xf32>
    tpu.vector_store %arg2[%c0_1, %c0_2], %12 {strides = array<i32>} : memref<5x48xf32, #tpu.memory_space<vmem>>, vector<5x48xf32>,
    return
  }
  func.func @transform_0(%arg0: i32) -> (i32, i32) {
    %c0_i32 = arith.constant 0 : i32
    %c0_i32_0 = arith.constant 0 : i32
    return %c0_i32, %arg0 : i32, i32
  }
  func.func @transform_1(%arg0: i32) -> (i32, i32) {
    %c0_i32 = arith.constant 0 : i32
    %c0_i32_0 = arith.constant 0 : i32
    return %c0_i32, %arg0 : i32, i32
  }
}

</mosaic_0001>

<llo_original>
// kernel: dempster_normalize.1
$region0: #{dempster_normalize.1}
  #allocation0 [shape = 'u32[]', space=smem, size = 0x4, offset = 0x4, fixed_abs, tag = 'smem constant byte address 0x4 - core index']
  #allocation1 [shape = 'u32[144,128]{1,0:T(1,128)}', space=vmem, size = 0x12000, scoped, tag = 'internal scratch']
  %s0 = inlined_call_operand.vmem [shape: f32[5,48], index: 0, kind: input, shape index: {}]
  %s1 = inlined_call_operand.vmem [shape: f32[5,48], index: 1, kind: output, shape index: {}]
  %s2 = sld [smem:[#allocation0]]
  $region14: #{dempster_normalize.1} parent=0
    _
  %s4 = ssub.s32 1, %s2
  %s5 = scalar_select 0, %s4, %s2
  // Predicated region
  $region2: #{dempster_normalize.1} parent=0 // pred_check
    _
  $region3: #{dempster_normalize.1} parent=0 // pred_check_branch
    %7 = sbr.rel (0) target = $region5
  $region4: #{dempster_normalize.1} parent=0 // pred_region
    _
  $region5: #{dempster_normalize.1} parent=0 // pred_fallthru
    _
  %v8 = vld [vmem:[%s0] sm:$0x1f]
  %v10 = vrot.slane %v8, 1
  %v12 = vadd.f32 %v8, %v10
  %v13 = vrot.slane %v8, 2
  %v15 = vadd.f32 %v12, %v13
  %v16 = vrot.slane %v8, 3
  %v18 = vadd.f32 %v15, %v16
  %v19 = vrot.slane %v8, 4
  %v21 = vadd.f32 %v18, %v19
  %v22 = vrcp.pop %v21
  %v23 = vlaneseq
  %v24 = vshrl.u32 %v23, 7
  %v25 = vsub.s32 0, %v24
  %v26 = vrot.slane %v22, %v25
  %v27 = vmul.f32 %v8, %v26
  %vm28 = vcmask 389120
  %29 = vst.msk [vmem:[%s1] sm:$0x1f] %vm28, %v27
  // Predicated region
  $region6: #{dempster_normalize.1} parent=0 // pred_check
    _
  $region7: #{dempster_normalize.1} parent=0 // pred_check_branch
    %31 = sbr.rel (0) target = $region9
  $region8: #{dempster_normalize.1} parent=0 // pred_region
    _
  $region9: #{dempster_normalize.1} parent=0 // pred_fallthru
    _
  // Predicated region
  $region10: #{dempster_normalize.1} parent=0 // pred_check
    _
  $region11: #{dempster_normalize.1} parent=0 // pred_check_branch
    %33 = sbr.rel (0) target = $region13
  $region12: #{dempster_normalize.1} parent=0 // pred_region
    _
  $region13: #{dempster_normalize.1} parent=0 // pred_fallthru
    _

</llo_original>
